<compile_context>
chip_gen: v7x
topology: tpu7x:2x2x1
jax: 0.10.0
libtpu: 0.0.40
codegen_flags: <defaults>
</compile_context>

<pallas_src>
import functools

import jax
import jax.numpy as jnp
from jax.experimental import pallas as pl
from jax.experimental.pallas import tpu as pltpu


def _round_up(x: int, m: int) -> int:
    return ((x + m - 1) // m) * m


# ---------------------------------------------------------------------------
# Kernel
# ---------------------------------------------------------------------------
def _lm_head_kernel(x_ref, w_ref, o_ref, acc_ref, *, tk, x_resident):
    """Compute one (tm, tn) logits tile, reducing over the K (hidden) grid axis.

    x_ref:   (tm, Kp) resident activation panel  (x_resident=True)
             or (tm, tk) activation tile          (x_resident=False)
    w_ref:   (tk, tn) lm_head weight tile, pre-transposed to (hidden, vocab)
    o_ref:   (tm, tn) logits tile
    acc_ref: (tm, tn) f32 accumulator scratch (persists across the K axis)
    """
    k = pl.program_id(2)

    @pl.when(k == 0)
    def _():
        acc_ref[...] = jnp.zeros_like(acc_ref)

    if x_resident:
        start = pl.multiple_of(k * tk, tk)
        x = x_ref[:, pl.ds(start, tk)]
    else:
        x = x_ref[...]

    acc_ref[...] += jnp.dot(x, w_ref[...], preferred_element_type=jnp.float32)

    @pl.when(k == pl.num_programs(2) - 1)
    def _():
        o_ref[...] = acc_ref[...].astype(o_ref.dtype)


# ---------------------------------------------------------------------------
# Tile / VMEM-budget selection
# ---------------------------------------------------------------------------
def _vmem_budget_bytes() -> int:
    """3/4 of per-core VMEM: ~96 MiB on v5e/v6e, ~48 MiB on v7x, 48 MiB fallback."""
    try:
        cap = int(getattr(pltpu.get_tpu_info(), "vmem_capacity_bytes", 0))
    except Exception:
        cap = 0
    if cap <= 0:
        cap = 64 * 1024 * 1024
    return min((cap * 3) // 4, 100 * 1024 * 1024)


def _pick_tiles_static(K: int, V: int):
    """tn/tk depend only on the static weight shape (chosen once at __init__)."""
    Vp = _round_up(V, 128)
    tn = next(c for c in (512, 384, 256, 128) if Vp % c == 0)   # lane-dense stores
    Kp = _round_up(K, 128)
    tk = next(c for c in (2048, 1024, 512, 256, 128) if Kp % c == 0)
    return tn, tk, Kp, Vp


def _pick_tm(M: int, Kp: int, tn: int, tk: int,
             x_item: int, w_item: int, o_item: int, budget: int):
    """Largest row-tile (and whether a full-K x panel fits) within the VMEM budget."""
    tm_cap = max(16, _round_up(M, 16))      # bf16 packs 2 rows/sublane -> multiple of 16
    if tm_cap <= 128:
        cands = (tm_cap,)
    else:
        cands = tuple(t for t in (1024, 512, 256, 128) if t <= tm_cap)

    def vmem_use(tm, x_cols):
        return (2 * tm * x_cols * x_item      # double-buffered activation panel/tile
                + 2 * tk * tn * w_item        # double-buffered weight tile
                + tm * tn * 4                 # f32 accumulator scratch
                + 2 * tm * tn * o_item)       # double-buffered output tile

    for tm in cands:                          # prefer full-K resident activations
        if vmem_use(tm, Kp) <= budget:
            return tm, True
    for tm in cands:                          # fall back to K-tiled activations
        if vmem_use(tm, tk) <= budget:
            return tm, False
    return cands[-1], False


# ---------------------------------------------------------------------------
# pallas_call wrapper
# ---------------------------------------------------------------------------
@functools.partial(
    jax.jit,
    static_argnames=("tm", "tn", "tk", "v_out", "x_resident", "vmem_limit"),
)
def _lm_head_matmul(x2d, weight_t, *, tm, tn, tk, v_out, x_resident, vmem_limit):
    """x2d: (M, H) activations; weight_t: (Kp, Vp) pre-transposed/padded lm_head weight."""
    M, K = x2d.shape
    Kp, Vp = weight_t.shape
    out_dtype = x2d.dtype

    # Pad only the (cheap) activations; weight was padded once at init.
    Mp = _round_up(M, tm)
    if (Mp, Kp) != (M, K):
        x2d = jnp.pad(x2d, ((0, Mp - M), (0, Kp - K)))

    grid = (Mp // tm, Vp // tn, Kp // tk)

    x_item = jnp.dtype(x2d.dtype).itemsize
    w_item = jnp.dtype(weight_t.dtype).itemsize
    o_item = jnp.dtype(out_dtype).itemsize
    x_reads = 1 if x_resident else grid[1]    # resident panel -> x read once per row-tile
    cost = pl.CostEstimate(
        flops=2 * Mp * Vp * Kp,
        bytes_accessed=(Mp * Kp * x_item * x_reads
                        + Kp * Vp * w_item * grid[0]
                        + Mp * Vp * o_item),
        transcendentals=0,
    )

    if x_resident:
        x_spec = pl.BlockSpec((tm, Kp), lambda i, j, k: (i, 0))
    else:
        x_spec = pl.BlockSpec((tm, tk), lambda i, j, k: (i, k))

    kernel = functools.partial(_lm_head_kernel, tk=tk, x_resident=x_resident)

    out = pl.pallas_call(
        kernel,
        out_shape=jax.ShapeDtypeStruct((Mp, Vp), out_dtype),
        grid_spec=pltpu.PrefetchScalarGridSpec(
            num_scalar_prefetch=0,
            grid=grid,
            in_specs=[
                x_spec,                                            # activations
                pl.BlockSpec((tk, tn), lambda i, j, k: (k, j)),    # weight (H, V) layout
            ],
            out_specs=pl.BlockSpec((tm, tn), lambda i, j, k: (i, j)),
            scratch_shapes=[pltpu.VMEM((tm, tn), jnp.float32)],
        ),
        compiler_params=pltpu.CompilerParams(
            dimension_semantics=("parallel", "parallel", "arbitrary"),
            vmem_limit_bytes=vmem_limit,
        ),
        cost_estimate=cost,
    )(x2d, weight_t)

    if Mp != M:
        out = out[:M]
    if Vp != v_out:
        out = out[:, :v_out]
    return out


# ---------------------------------------------------------------------------
# Module wrapper
# ---------------------------------------------------------------------------
class LMPipeLayerPallas:
    """JAX/Pallas equivalent of LMPipeLayer (LM head, no bias): (logits, labels)."""

    def __init__(self, weight):
        # weight: (vocab, hidden), same layout as nn.Linear(hidden, vocab, bias=False).weight
        V, K = weight.shape
        self.V, self.K = int(V), int(K)
        self.tn, self.tk, self.Kp, self.Vp = _pick_tiles_static(self.K, self.V)

        # Pre-pad + pre-transpose the static parameter ONCE (amortized to zero):
        w = weight
        if (self.Vp, self.Kp) != (V, K):
            w = jnp.pad(w, ((0, self.Vp - V), (0, self.Kp - K)))
        self.weight_t = jnp.asarray(w.T)        # (Kp, Vp): MXU-native (k, n) feed

    def __call__(self, ipt):
        hidden_states, labels = ipt
        B, S, H = hidden_states.shape
        assert H == self.K, "hidden dim mismatch between activations and lm_head weight"

        x2d = hidden_states.reshape(B * S, H)
        x_item = jnp.dtype(hidden_states.dtype).itemsize
        w_item = jnp.dtype(self.weight_t.dtype).itemsize
        budget = _vmem_budget_bytes()
        tm, x_resident = _pick_tm(B * S, self.Kp, self.tn, self.tk,
                                  x_item, w_item, x_item, budget)

        logits = _lm_head_matmul(
            x2d, self.weight_t,
            tm=tm, tn=self.tn, tk=self.tk,
            v_out=self.V, x_resident=x_resident, vmem_limit=budget,
        )
        return (logits.reshape(B, S, self.V), labels)


# ---------------------------------------------------------------------------
# Demo / correctness check
# ---------------------------------------------------------------------------
if __name__ == "__main__":
    # Small shapes consistent with the forward: (batch, seq, hidden) -> (batch, seq, vocab)
    batch, seq, hidden, vocab = 2, 8, 256, 512

    key = jax.random.PRNGKey(0)
    k_x, k_w, k_lbl = jax.random.split(key, 3)

    # bf16 operands (MXU path), f32 accumulation inside the kernel.
    hidden_states = jax.random.normal(
        k_x, (batch, seq, hidden), dtype=jnp.float32
    ).astype(jnp.bfloat16)
    lm_head_weight = (
        jax.random.normal(k_w, (vocab, hidden), dtype=jnp.float32) * (hidden ** -0.5)
    ).astype(jnp.bfloat16)
    labels = jax.random.randint(k_lbl, (batch, seq), 0, vocab, dtype=jnp.int32)

    layer = LMPipeLayerPallas(lm_head_weight)
    logits, labels_out = layer((hidden_states, labels))
    logits = jax.block_until_ready(logits)

    # Reference: same contraction with f32 accumulation, then cast to bf16.
    ref = jnp.einsum(
        "bsh,vh->bsv", hidden_states, lm_head_weight,
        preferred_element_type=jnp.float32,
    ).astype(jnp.bfloat16)

    assert logits.shape == (batch, seq, vocab)
    assert logits.dtype == hidden_states.dtype
    assert labels_out.shape == labels.shape
    assert jnp.allclose(
        logits.astype(jnp.float32), ref.astype(jnp.float32), atol=2e-2, rtol=2e-2
    )

    print("KERNEL_OK")
</pallas_src>

<mosaic_0001>
module attributes {stable_mosaic.version = 11 : i64} {
  func.func @_lm_head_kernel(%arg0: i32, %arg1: i32, %arg2: i32, %arg3: memref<16x256xbf16, #tpu.memory_space<vmem>>, %arg4: memref<256x512xbf16, #tpu.memory_space<vmem>>, %arg5: memref<16x512xbf16, #tpu.memory_space<vmem>>, %arg6: memref<16x512xf32, #tpu.memory_space<vmem>>) attributes {dimension_semantics = [#tpu.dimension_semantics<parallel>, #tpu.dimension_semantics<parallel>, #tpu.dimension_semantics<arbitrary>], iteration_bounds = array<i64: 1, 1, 1>, scalar_prefetch = 0 : i64, scratch_operands = 1 : i64, tpu.core_type = #tpu.core_type<tc>, window_params = [{transform_indices = @transform_0, window_bounds = array<i64: 16, 256>}, {transform_indices = @transform_1, window_bounds = array<i64: 256, 512>}, {transform_indices = @transform_2, window_bounds = array<i64: 16, 512>}]} {
    %c0_i32 = arith.constant 0 : i32
    %0 = arith.cmpi eq, %arg2, %c0_i32 : i32
    %1 = arith.extui %0 : i1 to i32
    %c0_i32_0 = arith.constant 0 : i32
    %2 = arith.cmpi ne, %1, %c0_i32_0 : i32
    scf.if %2 {
      %cst_9 = arith.constant 0.000000e+00 : f32
      %15 = vector.broadcast %cst_9 : f32 to vector<16x512xf32>
      %c0_10 = arith.constant 0 : index
      %c0_11 = arith.constant 0 : index
      %16 = vector.load %arg6[%c0_10, %c0_11] : memref<16x512xf32, #tpu.memory_space<vmem>>, vector<16x512xf32>
      tpu.vector_store %arg6[%c0_10, %c0_11], %15 {strides = array<i32>} : memref<16x512xf32, #tpu.memory_space<vmem>>, vector<16x512xf32>,
    } else {
    }
    %c256_i32 = arith.constant 256 : i32
    %3 = arith.muli %arg2, %c256_i32 : i32
    %4 = tpu.assume_multiple %3, 256 : i32
    %c0 = arith.constant 0 : index
    %5 = arith.index_cast %4 : i32 to index
    %6 = vector.load %arg3[%c0, %5] : memref<16x256xbf16, #tpu.memory_space<vmem>>, vector<16x256xbf16>
    %c0_1 = arith.constant 0 : index
    %c0_2 = arith.constant 0 : index
    %7 = vector.load %arg6[%c0_1, %c0_2] : memref<16x512xf32, #tpu.memory_space<vmem>>, vector<16x512xf32>
    %c0_3 = arith.constant 0 : index
    %c0_4 = arith.constant 0 : index
    %8 = vector.load %arg4[%c0_3, %c0_4] : memref<256x512xbf16, #tpu.memory_space<vmem>>, vector<256x512xbf16>
    %cst = arith.constant dense<0.000000e+00> : vector<16x512xf32>
    %9 = tpu.matmul %6, %8, %cst {dimension_numbers = #tpu.dot_dimension_numbers<[1], [0], [0], [1], [0, 0, 1, 1], [], []>} : vector<16x256xbf16>, vector<256x512xbf16>, vector<16x512xf32> -> vector<16x512xf32>
    %10 = arith.addf %7, %9 : vector<16x512xf32>
    %c0_5 = arith.constant 0 : index
    %c0_6 = arith.constant 0 : index
    %11 = vector.load %arg6[%c0_5, %c0_6] : memref<16x512xf32, #tpu.memory_space<vmem>>, vector<16x512xf32>
    tpu.vector_store %arg6[%c0_5, %c0_6], %10 {strides = array<i32>} : memref<16x512xf32, #tpu.memory_space<vmem>>, vector<16x512xf32>,
    %c0_i32_7 = arith.constant 0 : i32
    %12 = arith.cmpi eq, %arg2, %c0_i32_7 : i32
    %13 = arith.extui %12 : i1 to i32
    %c0_i32_8 = arith.constant 0 : i32
    %14 = arith.cmpi ne, %13, %c0_i32_8 : i32
    scf.if %14 {
      %c0_9 = arith.constant 0 : index
      %c0_10 = arith.constant 0 : index
      %15 = vector.load %arg6[%c0_9, %c0_10] : memref<16x512xf32, #tpu.memory_space<vmem>>, vector<16x512xf32>
      %16 = arith.truncf %15 : vector<16x512xf32> to vector<16x512xbf16>
      %c0_11 = arith.constant 0 : index
      %c0_12 = arith.constant 0 : index
      %17 = vector.load %arg5[%c0_11, %c0_12] : memref<16x512xbf16, #tpu.memory_space<vmem>>, vector<16x512xbf16>
      tpu.vector_store %arg5[%c0_11, %c0_12], %16 {strides = array<i32>} : memref<16x512xbf16, #tpu.memory_space<vmem>>, vector<16x512xbf16>,
    } else {
    }
    return
  }
  func.func @transform_0(%arg0: i32, %arg1: i32, %arg2: i32) -> (i32, i32) {
    %c0_i32 = arith.constant 0 : i32
    %c0_i32_0 = arith.constant 0 : i32
    return %arg0, %c0_i32 : i32, i32
  }
  func.func @transform_1(%arg0: i32, %arg1: i32, %arg2: i32) -> (i32, i32) {
    %c0_i32 = arith.constant 0 : i32
    return %arg2, %arg1 : i32, i32
  }
  func.func @transform_2(%arg0: i32, %arg1: i32, %arg2: i32) -> (i32, i32) {
    %c0_i32 = arith.constant 0 : i32
    return %arg0, %arg1 : i32, i32
  }
}

</mosaic_0001>

<llo_original>
// kernel: _lm_head_matmul.1
$region0: #{_lm_head_matmul.1}
  #allocation0 [shape = 'u32[]', space=smem, size = 0x4, offset = 0x4, fixed_abs, tag = 'smem constant byte address 0x4 - core index']
  #allocation1 [shape = 'u32[144,128]{1,0:T(1,128)}', space=vmem, size = 0x12000, scoped, tag = 'internal scratch']
  #allocation2 [shape = 'f32[16,512]{1,0:T(8,128)}', space=vmem, size = 0x8000, scoped, tag = 'scratch operand']
  %s0 = inlined_call_operand.hbm [shape: bf16[16,256], index: 0, kind: input, shape index: {}]
  %s1 = inlined_call_operand.hbm [shape: bf16[256,512], index: 1, kind: input, shape index: {}]
  %s2 = inlined_call_operand.hbm [shape: bf16[16,512], index: 2, kind: output, shape index: {}]
  %s3 = sld [smem:[#allocation0]]
  $region34: #{_lm_head_matmul.1} parent=0
    _
  %s5 = ssub.s32 1, %s3
  %s6 = scalar_select 0, %s5, %s3
  $region1: #{_lm_head_matmul.1} parent=0
    #allocation3 [shape = 'u8[8192]{0}', space=vmem, size = 0x2000, scoped, tag = 'input window, operand 0, single buffered']
    #allocation4 [shape = 's32[1]{0}', space=sflag, size = 0x4, scoped, tag = 'scoped memory for _lm_head_matmul.1']
    #allocation5 [shape = 's32[1]{0}', space=sflag, size = 0x4, scoped, tag = 'scoped memory for _lm_head_matmul.1']
    #allocation6 [shape = 'u8[262144]{0}', space=vmem, size = 0x40000, scoped, tag = 'input window, operand 1, single buffered']
    #allocation7 [shape = 's32[1]{0}', space=sflag, size = 0x4, scoped, tag = 'scoped memory for _lm_head_matmul.1']
    #allocation8 [shape = 'u8[16384]{0}', space=vmem, size = 0x4000, scoped, tag = 'output window, operand 0, single buffered']
    %7 = vsyncpa [#allocation4], 0
    %8 = vsyncpa [#allocation7], 0
    %9 = vsyncpa [#allocation5], 0
    // Predicated region
    $region2: #{_lm_head_matmul.1} parent=1 // pred_check
      _
    $region3: #{_lm_head_matmul.1} parent=1 // pred_check_branch
      %11 = sbr.rel (0) target = $region5
    $region4: #{_lm_head_matmul.1} parent=1 // pred_region
      %s13 = ssub.s32 256, 256
      %14 = vsyncadd [#allocation4], %s13
      %s15 = sshll.u32 [#allocation3], 4
      %s16 = int_to_ptr.vmem [resolvable:$true] %s15
      %21 = dma.hbm_to_vmem [thread:$0]  %s0, 256, %s16, [#allocation4], 128, 128, 8
    $region5: #{_lm_head_matmul.1} parent=1 // pred_fallthru
      _
    // Predicated region
    $region6: #{_lm_head_matmul.1} parent=1 // pred_check
      _
    $region7: #{_lm_head_matmul.1} parent=1 // pred_check_branch
      %23 = sbr.rel (0) target = $region9
    $region8: #{_lm_head_matmul.1} parent=1 // pred_region
      %s25 = ssub.s32 8192, 8192
      %26 = vsyncadd [#allocation7], %s25
      %s27 = sshll.u32 [#allocation6], 4
      %s28 = int_to_ptr.vmem [resolvable:$true] %s27
      %33 = dma.hbm_to_vmem [thread:$0]  %s1, 8192, %s28, [#allocation7], 256, 256, 16
    $region9: #{_lm_head_matmul.1} parent=1 // pred_fallthru
      _
    // Predicated region
    $region10: #{_lm_head_matmul.1} parent=1 // pred_check
      _
    $region11: #{_lm_head_matmul.1} parent=1 // pred_check_branch
      %35 = sbr.rel (0) target = $region13
    $region12: #{_lm_head_matmul.1} parent=1 // pred_region
      %36 = dma.done [#allocation4], 256
    $region13: #{_lm_head_matmul.1} parent=1 // pred_fallthru
      _
    // Predicated region
    $region14: #{_lm_head_matmul.1} parent=1 // pred_check
      _
    $region15: #{_lm_head_matmul.1} parent=1 // pred_check_branch
      %38 = sbr.rel (0) target = $region17
    $region16: #{_lm_head_matmul.1} parent=1 // pred_region
      %39 = dma.done [#allocation7], 8192
    $region17: #{_lm_head_matmul.1} parent=1 // pred_fallthru
      _
    %p40 = scmp.eq.s32.totalorder 0, 0
    // Predicated region
    $region18: #{_lm_head_matmul.1} parent=1 // pred_check
      %p41 = pneg %p40
    $region19: #{_lm_head_matmul.1} parent=1 // pred_check_branch
      %43 = sbr.rel (%p41) target = $region21
    $region20: #{_lm_head_matmul.1} parent=1 // pred_region
      %44 = vst [vmem:[#allocation2] sm:$0xff] 0.0
      %45 = vst [vmem:[#allocation2 + $0x8] sm:$0xff] 0.0
      %46 = vst [vmem:[#allocation2 + $0x10] sm:$0xff] 0.0
      %47 = vst [vmem:[#allocation2 + $0x18] sm:$0xff] 0.0
      %48 = vst [vmem:[#allocation2 + $0x20] sm:$0xff] 0.0
      %49 = vst [vmem:[#allocation2 + $0x28] sm:$0xff] 0.0
      %50 = vst [vmem:[#allocation2 + $0x30] sm:$0xff] 0.0
      %51 = vst [vmem:[#allocation2 + $0x38] sm:$0xff] 0.0
    $region21: #{_lm_head_matmul.1} parent=1 // pred_fallthru
      _
    %s52 = smul.u32 0, 256
    %s53 = sshra.s32 %s52, 7
    %s54 = sand.u32 %s52, 127
    %s55 = smul.addr %s53, 4
    %s56 = scalar_lea.vmem [#allocation3], %s55
    %v57 = vld [vmem:[%s56] sm:$0xff]
    %v58 = vld [vmem:[%s56 + $0x8] sm:$0xff]
    %v59 = vld [vmem:[#allocation2] sm:$0xff]
    %v60 = vld [vmem:[#allocation2 + $0x8] sm:$0xff]
    %v61 = vld [vmem:[#allocation2 + $0x10] sm:$0xff]
    %v62 = vld [vmem:[#allocation2 + $0x18] sm:$0xff]
    %v63 = vld [vmem:[#allocation2 + $0x20] sm:$0xff]
    %v64 = vld [vmem:[#allocation2 + $0x28] sm:$0xff]
    %v65 = vld [vmem:[#allocation2 + $0x30] sm:$0xff]
    %v66 = vld [vmem:[#allocation2 + $0x38] sm:$0xff]
    %v67 = vld [vmem:[#allocation6] sm:$0xff]
    %v68 = vld [vmem:[#allocation6 + $0x8] sm:$0xff]
    %v69 = vld [vmem:[#allocation6 + $0x10] sm:$0xff]
    %v70 = vld [vmem:[#allocation6 + $0x18] sm:$0xff]
    %v71 = vld [vmem:[#allocation6 + $0x20] sm:$0xff]
    %v72 = vld [vmem:[#allocation6 + $0x28] sm:$0xff]
    %v73 = vld [vmem:[#allocation6 + $0x30] sm:$0xff]
    %v74 = vld [vmem:[#allocation6 + $0x38] sm:$0xff]
    %v75 = vld [vmem:[#allocation6 + $0x40] sm:$0xff]
    %v76 = vld [vmem:[#allocation6 + $0x48] sm:$0xff]
    %v77 = vld [vmem:[#allocation6 + $0x50] sm:$0xff]
    %v78 = vld [vmem:[#allocation6 + $0x58] sm:$0xff]
    %v79 = vld [vmem:[#allocation6 + $0x60] sm:$0xff]
    %v80 = vld [vmem:[#allocation6 + $0x68] sm:$0xff]
    %v81 = vld [vmem:[#allocation6 + $0x70] sm:$0xff]
    %v82 = vld [vmem:[#allocation6 + $0x78] sm:$0xff]
    %v83 = vld [vmem:[#allocation6 + $0x80] sm:$0xff]
    %v84 = vld [vmem:[#allocation6 + $0x88] sm:$0xff]
    %v85 = vld [vmem:[#allocation6 + $0x90] sm:$0xff]
    %v86 = vld [vmem:[#allocation6 + $0x98] sm:$0xff]
    %v87 = vld [vmem:[#allocation6 + $0xa0] sm:$0xff]
    %v88 = vld [vmem:[#allocation6 + $0xa8] sm:$0xff]
    %v89 = vld [vmem:[#allocation6 + $0xb0] sm:$0xff]
    %v90 = vld [vmem:[#allocation6 + $0xb8] sm:$0xff]
    %v91 = vld [vmem:[#allocation6 + $0xc0] sm:$0xff]
    %v92 = vld [vmem:[#allocation6 + $0xc8] sm:$0xff]
    %v93 = vld [vmem:[#allocation6 + $0xd0] sm:$0xff]
    %v94 = vld [vmem:[#allocation6 + $0xd8] sm:$0xff]
    %v95 = vld [vmem:[#allocation6 + $0xe0] sm:$0xff]
    %v96 = vld [vmem:[#allocation6 + $0xe8] sm:$0xff]
    %v97 = vld [vmem:[#allocation6 + $0xf0] sm:$0xff]
    %v98 = vld [vmem:[#allocation6 + $0xf8] sm:$0xff]
    %v99 = vld [vmem:[#allocation6 + $0x100] sm:$0xff]
    %v100 = vld [vmem:[#allocation6 + $0x108] sm:$0xff]
    %v101 = vld [vmem:[#allocation6 + $0x110] sm:$0xff]
    %v102 = vld [vmem:[#allocation6 + $0x118] sm:$0xff]
    %v103 = vld [vmem:[#allocation6 + $0x120] sm:$0xff]
    %v104 = vld [vmem:[#allocation6 + $0x128] sm:$0xff]
    %v105 = vld [vmem:[#allocation6 + $0x130] sm:$0xff]
    %v106 = vld [vmem:[#allocation6 + $0x138] sm:$0xff]
    %v107 = vld [vmem:[#allocation6 + $0x140] sm:$0xff]
    %v108 = vld [vmem:[#allocation6 + $0x148] sm:$0xff]
    %v109 = vld [vmem:[#allocation6 + $0x150] sm:$0xff]
    %v110 = vld [vmem:[#allocation6 + $0x158] sm:$0xff]
    %v111 = vld [vmem:[#allocation6 + $0x160] sm:$0xff]
    %v112 = vld [vmem:[#allocation6 + $0x168] sm:$0xff]
    %v113 = vld [vmem:[#allocation6 + $0x170] sm:$0xff]
    %v114 = vld [vmem:[#allocation6 + $0x178] sm:$0xff]
    %v115 = vld [vmem:[#allocation6 + $0x180] sm:$0xff]
    %v116 = vld [vmem:[#allocation6 + $0x188] sm:$0xff]
    %v117 = vld [vmem:[#allocation6 + $0x190] sm:$0xff]
    %v118 = vld [vmem:[#allocation6 + $0x198] sm:$0xff]
    %v119 = vld [vmem:[#allocation6 + $0x1a0] sm:$0xff]
    %v120 = vld [vmem:[#allocation6 + $0x1a8] sm:$0xff]
    %v121 = vld [vmem:[#allocation6 + $0x1b0] sm:$0xff]
    %v122 = vld [vmem:[#allocation6 + $0x1b8] sm:$0xff]
    %v123 = vld [vmem:[#allocation6 + $0x1c0] sm:$0xff]
    %v124 = vld [vmem:[#allocation6 + $0x1c8] sm:$0xff]
    %v125 = vld [vmem:[#allocation6 + $0x1d0] sm:$0xff]
    %v126 = vld [vmem:[#allocation6 + $0x1d8] sm:$0xff]
    %v127 = vld [vmem:[#allocation6 + $0x1e0] sm:$0xff]
    %v128 = vld [vmem:[#allocation6 + $0x1e8] sm:$0xff]
    %v129 = vld [vmem:[#allocation6 + $0x1f0] sm:$0xff]
    %v130 = vld [vmem:[#allocation6 + $0x1f8] sm:$0xff]
    %v133 = vunpack.c.l.b16 %v57
    %v134 = vunpack.c.h.b16 %v57
    %v135 = vunpack.c.l.b16 %v58
    %v136 = vunpack.c.h.b16 %v58
    %v137 = vpack.c.b16 %v135, %v133
    %v138 = vpack.c.b16 %v136, %v134
    %v205 = vunpack.c.l.b16 %v67
    %v206 = vunpack.c.h.b16 %v67
    %v207 = vunpack.c.l.b16 %v68
    %v208 = vunpack.c.h.b16 %v68
    %v209 = vunpack.c.l.b16 %v69
    %v210 = vunpack.c.h.b16 %v69
    %v211 = vunpack.c.l.b16 %v70
    %v212 = vunpack.c.h.b16 %v70
    %v213 = vunpack.c.l.b16 %v71
    %v214 = vunpack.c.h.b16 %v71
    %v215 = vunpack.c.l.b16 %v72
    %v216 = vunpack.c.h.b16 %v72
    %v217 = vunpack.c.l.b16 %v73
    %v218 = vunpack.c.h.b16 %v73
    %v219 = vunpack.c.l.b16 %v74
    %v220 = vunpack.c.h.b16 %v74
    %v221 = vunpack.c.l.b16 %v75
    %v222 = vunpack.c.h.b16 %v75
    %v223 = vunpack.c.l.b16 %v76
    %v224 = vunpack.c.h.b16 %v76
    %v225 = vunpack.c.l.b16 %v77
    %v226 = vunpack.c.h.b16 %v77
    %v227 = vunpack.c.l.b16 %v78
    %v228 = vunpack.c.h.b16 %v78
    %v229 = vunpack.c.l.b16 %v79
    %v230 = vunpack.c.h.b16 %v79
    %v231 = vunpack.c.l.b16 %v80
    %v232 = vunpack.c.h.b16 %v80
    %v233 = vunpack.c.l.b16 %v81
    %v234 = vunpack.c.h.b16 %v81
    %v235 = vunpack.c.l.b16 %v82
    %v236 = vunpack.c.h.b16 %v82
    %v237 = vunpack.c.l.b16 %v83
    %v238 = vunpack.c.h.b16 %v83
    %v239 = vunpack.c.l.b16 %v84
    %v240 = vunpack.c.h.b16 %v84
    %v241 = vunpack.c.l.b16 %v85
    %v242 = vunpack.c.h.b16 %v85
    %v243 = vunpack.c.l.b16 %v86
    %v244 = vunpack.c.h.b16 %v86
    %v245 = vunpack.c.l.b16 %v87
    %v246 = vunpack.c.h.b16 %v87
    %v247 = vunpack.c.l.b16 %v88
    %v248 = vunpack.c.h.b16 %v88
    %v249 = vunpack.c.l.b16 %v89
    %v250 = vunpack.c.h.b16 %v89
    %v251 = vunpack.c.l.b16 %v90
    %v252 = vunpack.c.h.b16 %v90
    %v253 = vunpack.c.l.b16 %v91
    %v254 = vunpack.c.h.b16 %v91
    %v255 = vunpack.c.l.b16 %v92
    %v256 = vunpack.c.h.b16 %v92
    %v257 = vunpack.c.l.b16 %v93
    %v258 = vunpack.c.h.b16 %v93
    %v259 = vunpack.c.l.b16 %v94
    %v260 = vunpack.c.h.b16 %v94
    %v261 = vunpack.c.l.b16 %v95
    %v262 = vunpack.c.h.b16 %v95
    %v263 = vunpack.c.l.b16 %v96
    %v264 = vunpack.c.h.b16 %v96
    %v265 = vunpack.c.l.b16 %v97
    %v266 = vunpack.c.h.b16 %v97
    %v267 = vunpack.c.l.b16 %v98
    %v268 = vunpack.c.h.b16 %v98
    %v269 = vunpack.c.l.b16 %v99
    %v270 = vunpack.c.h.b16 %v99
    %v271 = vunpack.c.l.b16 %v100
    %v272 = vunpack.c.h.b16 %v100
    %v273 = vunpack.c.l.b16 %v101
    %v274 = vunpack.c.h.b16 %v101
    %v275 = vunpack.c.l.b16 %v102
    %v276 = vunpack.c.h.b16 %v102
    %v277 = vunpack.c.l.b16 %v103
    %v278 = vunpack.c.h.b16 %v103
    %v279 = vunpack.c.l.b16 %v104
    %v280 = vunpack.c.h.b16 %v104
    %v281 = vunpack.c.l.b16 %v105
    %v282 = vunpack.c.h.b16 %v105
    %v283 = vunpack.c.l.b16 %v106
    %v284 = vunpack.c.h.b16 %v106
    %v285 = vunpack.c.l.b16 %v107
    %v286 = vunpack.c.h.b16 %v107
    %v287 = vunpack.c.l.b16 %v108
    %v288 = vunpack.c.h.b16 %v108
    %v289 = vunpack.c.l.b16 %v109
    %v290 = vunpack.c.h.b16 %v109
    %v291 = vunpack.c.l.b16 %v110
    %v292 = vunpack.c.h.b16 %v110
    %v293 = vunpack.c.l.b16 %v111
    %v294 = vunpack.c.h.b16 %v111
    %v295 = vunpack.c.l.b16 %v112
    %v296 = vunpack.c.h.b16 %v112
    %v297 = vunpack.c.l.b16 %v113
    %v298 = vunpack.c.h.b16 %v113
    %v299 = vunpack.c.l.b16 %v114
    %v300 = vunpack.c.h.b16 %v114
    %v301 = vunpack.c.l.b16 %v115
    %v302 = vunpack.c.h.b16 %v115
    %v303 = vunpack.c.l.b16 %v116
    %v304 = vunpack.c.h.b16 %v116
    %v305 = vunpack.c.l.b16 %v117
    %v306 = vunpack.c.h.b16 %v117
    %v307 = vunpack.c.l.b16 %v118
    %v308 = vunpack.c.h.b16 %v118
    %v309 = vunpack.c.l.b16 %v119
    %v310 = vunpack.c.h.b16 %v119
    %v311 = vunpack.c.l.b16 %v120
    %v312 = vunpack.c.h.b16 %v120
    %v313 = vunpack.c.l.b16 %v121
    %v314 = vunpack.c.h.b16 %v121
    %v315 = vunpack.c.l.b16 %v122
    %v316 = vunpack.c.h.b16 %v122
    %v317 = vunpack.c.l.b16 %v123
    %v318 = vunpack.c.h.b16 %v123
    %v319 = vunpack.c.l.b16 %v124
    %v320 = vunpack.c.h.b16 %v124
    %v321 = vunpack.c.l.b16 %v125
    %v322 = vunpack.c.h.b16 %v125
    %v323 = vunpack.c.l.b16 %v126
    %v324 = vunpack.c.h.b16 %v126
    %v325 = vunpack.c.l.b16 %v127
    %v326 = vunpack.c.h.b16 %v127
    %v327 = vunpack.c.l.b16 %v128
    %v328 = vunpack.c.h.b16 %v128
    %v329 = vunpack.c.l.b16 %v129
    %v330 = vunpack.c.h.b16 %v129
    %v331 = vunpack.c.l.b16 %v130
    %v332 = vunpack.c.h.b16 %v130
    %v333 = vpack.c.b16 %v209, %v205
    %v334 = vpack.c.b16 %v210, %v206
    %v335 = vpack.c.b16 %v211, %v207
    %v336 = vpack.c.b16 %v212, %v208
    %v337 = vpack.c.b16 %v217, %v213
    %v338 = vpack.c.b16 %v218, %v214
    %v339 = vpack.c.b16 %v219, %v215
    %v340 = vpack.c.b16 %v220, %v216
    %v341 = vpack.c.b16 %v225, %v221
    %v342 = vpack.c.b16 %v226, %v222
    %v343 = vpack.c.b16 %v227, %v223
    %v344 = vpack.c.b16 %v228, %v224
    %v345 = vpack.c.b16 %v233, %v229
    %v346 = vpack.c.b16 %v234, %v230
    %v347 = vpack.c.b16 %v235, %v231
    %v348 = vpack.c.b16 %v236, %v232
    %v349 = vpack.c.b16 %v241, %v237
    %v350 = vpack.c.b16 %v242, %v238
    %v351 = vpack.c.b16 %v243, %v239
    %v352 = vpack.c.b16 %v244, %v240
    %v353 = vpack.c.b16 %v249, %v245
    %v354 = vpack.c.b16 %v250, %v246
    %v355 = vpack.c.b16 %v251, %v247
    %v356 = vpack.c.b16 %v252, %v248
    %v357 = vpack.c.b16 %v257, %v253
    %v358 = vpack.c.b16 %v258, %v254
    %v359 = vpack.c.b16 %v259, %v255
    %v360 = vpack.c.b16 %v260, %v256
    %v361 = vpack.c.b16 %v265, %v261
    %v362 = vpack.c.b16 %v266, %v262
    %v363 = vpack.c.b16 %v267, %v263
    %v364 = vpack.c.b16 %v268, %v264
    %v365 = vpack.c.b16 %v273, %v269
    %v366 = vpack.c.b16 %v274, %v270
    %v367 = vpack.c.b16 %v275, %v271
    %v368 = vpack.c.b16 %v276, %v272
    %v369 = vpack.c.b16 %v281, %v277
    %v370 = vpack.c.b16 %v282, %v278
    %v371 = vpack.c.b16 %v283, %v279
    %v372 = vpack.c.b16 %v284, %v280
    %v373 = vpack.c.b16 %v289, %v285
    %v374 = vpack.c.b16 %v290, %v286
    %v375 = vpack.c.b16 %v291, %v287
    %v376 = vpack.c.b16 %v292, %v288
    %v377 = vpack.c.b16 %v297, %v293
    %v378 = vpack.c.b16 %v298, %v294
    %v379 = vpack.c.b16 %v299, %v295
    %v380 = vpack.c.b16 %v300, %v296
    %v381 = vpack.c.b16 %v305, %v301
    %v382 = vpack.c.b16 %v306, %v302
    %v383 = vpack.c.b16 %v307, %v303
    %v384 = vpack.c.b16 %v308, %v304
    %v385 = vpack.c.b16 %v313, %v309
    %v386 = vpack.c.b16 %v314, %v310
    %v387 = vpack.c.b16 %v315, %v311
    %v388 = vpack.c.b16 %v316, %v312
    %v389 = vpack.c.b16 %v321, %v317
    %v390 = vpack.c.b16 %v322, %v318
    %v391 = vpack.c.b16 %v323, %v319
    %v392 = vpack.c.b16 %v324, %v320
    %v393 = vpack.c.b16 %v329, %v325
    %v394 = vpack.c.b16 %v330, %v326
    %v395 = vpack.c.b16 %v331, %v327
    %v396 = vpack.c.b16 %v332, %v328
    %461 = vmatprep.subr.bf16.mxu0 %v334
    %462 = vmatpush1.bf16.msra.mxu0 %v333
    %463 = vmatprep.subr.bf16.mxu0 %v338
    %464 = vmatpush1.bf16.msra.mxu0 %v337
    %465 = vmatprep.subr.bf16.mxu0 %v342
    %466 = vmatpush1.bf16.msra.mxu0 %v341
    %467 = vmatprep.subr.bf16.mxu0 %v346
    %468 = vmatpush1.bf16.msra.mxu0 %v345
    %469 = vmatprep.subr.bf16.mxu0 %v350
    %470 = vmatpush1.bf16.msra.mxu0 %v349
    %471 = vmatprep.subr.bf16.mxu0 %v354
    %472 = vmatpush1.bf16.msra.mxu0 %v353
    %473 = vmatprep.subr.bf16.mxu0 %v358
    %474 = vmatpush1.bf16.msra.mxu0 %v357
    %475 = vmatprep.subr.bf16.mxu0 %v362
    %476 = vmatpush1.bf16.msra.mxu0 %v361
    %477 = vmatprep.subr.bf16.mxu0 %v366
    %478 = vmatpush1.bf16.msra.mxu0 %v365
    %479 = vmatprep.subr.bf16.mxu0 %v370
    %480 = vmatpush1.bf16.msra.mxu0 %v369
    %481 = vmatprep.subr.bf16.mxu0 %v374
    %482 = vmatpush1.bf16.msra.mxu0 %v373
    %483 = vmatprep.subr.bf16.mxu0 %v378
    %484 = vmatpush1.bf16.msra.mxu0 %v377
    %485 = vmatprep.subr.bf16.mxu0 %v382
    %486 = vmatpush1.bf16.msra.mxu0 %v381
    %487 = vmatprep.subr.bf16.mxu0 %v386
    %488 = vmatpush1.bf16.msra.mxu0 %v385
    %489 = vmatprep.subr.bf16.mxu0 %v390
    %490 = vmatpush1.bf16.msra.mxu0 %v389
    %491 = vmatprep.subr.bf16.mxu0 %v394
    %492 = vmatpush1.bf16.msra.mxu0 %v393
    %493 = vmatprep.mubr.bf16.mxu0 %v138
    %494 = vmatmul.mubr.bf16.gmra.mrb[0].mxu0 %v137
    %v495 = vpop.f32.mrb[0].mxu0
    %v496 = vadd.f32 0.0, %v495
    %v497 = vpop.f32.mrb[0].mxu0
    %v498 = vadd.f32 0.0, %v497
    %v499 = vpop.f32.mrb[0].mxu0
    %v500 = vadd.f32 0.0, %v499
    %v501 = vpop.f32.mrb[0].mxu0
    %v502 = vadd.f32 0.0, %v501
    %503 = vdwg.mxu0
    %504 = vmatprep.subr.bf16.mxu0 %v336
    %505 = vmatpush1.bf16.msra.mxu0 %v335
    %506 = vmatprep.subr.bf16.mxu0 %v340
    %507 = vmatpush1.bf16.msra.mxu0 %v339
    %508 = vmatprep.subr.bf16.mxu0 %v344
    %509 = vmatpush1.bf16.msra.mxu0 %v343
    %510 = vmatprep.subr.bf16.mxu0 %v348
    %511 = vmatpush1.bf16.msra.mxu0 %v347
    %512 = vmatprep.subr.bf16.mxu0 %v352
    %513 = vmatpush1.bf16.msra.mxu0 %v351
    %514 = vmatprep.subr.bf16.mxu0 %v356
    %515 = vmatpush1.bf16.msra.mxu0 %v355
    %516 = vmatprep.subr.bf16.mxu0 %v360
    %517 = vmatpush1.bf16.msra.mxu0 %v359
    %518 = vmatprep.subr.bf16.mxu0 %v364
    %519 = vmatpush1.bf16.msra.mxu0 %v363
    %520 = vmatprep.subr.bf16.mxu0 %v368
    %521 = vmatpush1.bf16.msra.mxu0 %v367
    %522 = vmatprep.subr.bf16.mxu0 %v372
    %523 = vmatpush1.bf16.msra.mxu0 %v371
    %524 = vmatprep.subr.bf16.mxu0 %v376
    %525 = vmatpush1.bf16.msra.mxu0 %v375
    %526 = vmatprep.subr.bf16.mxu0 %v380
    %527 = vmatpush1.bf16.msra.mxu0 %v379
    %528 = vmatprep.subr.bf16.mxu0 %v384
    %529 = vmatpush1.bf16.msra.mxu0 %v383
    %530 = vmatprep.subr.bf16.mxu0 %v388
    %531 = vmatpush1.bf16.msra.mxu0 %v387
    %532 = vmatprep.subr.bf16.mxu0 %v392
    %533 = vmatpush1.bf16.msra.mxu0 %v391
    %534 = vmatprep.subr.bf16.mxu0 %v396
    %535 = vmatpush1.bf16.msra.mxu0 %v395
    %536 = vmatprep.mubr.bf16.mxu0 %v138
    %537 = vmatmul.mubr.bf16.gmra.mrb[0].mxu0 %v137
    %v538 = vpop.f32.mrb[0].mxu0
    %v539 = vadd.f32 0.0, %v538
    %v540 = vpop.f32.mrb[0].mxu0
    %v541 = vadd.f32 0.0, %v540
    %v542 = vpop.f32.mrb[0].mxu0
    %v543 = vadd.f32 0.0, %v542
    %v544 = vpop.f32.mrb[0].mxu0
    %v545 = vadd.f32 0.0, %v544
    %546 = vdwg.mxu0
    %v547 = vadd.f32 %v59, %v496
    %v548 = vadd.f32 %v60, %v498
    %v549 = vadd.f32 %v61, %v539
    %v550 = vadd.f32 %v62, %v541
    %v551 = vadd.f32 %v63, %v500
    %v552 = vadd.f32 %v64, %v502
    %v553 = vadd.f32 %v65, %v543
    %v554 = vadd.f32 %v66, %v545
    %555 = vst [vmem:[#allocation2] sm:$0xff] %v547
    %556 = vst [vmem:[#allocation2 + $0x8] sm:$0xff] %v548
    %557 = vst [vmem:[#allocation2 + $0x10] sm:$0xff] %v549
    %558 = vst [vmem:[#allocation2 + $0x18] sm:$0xff] %v550
    %559 = vst [vmem:[#allocation2 + $0x20] sm:$0xff] %v551
    %560 = vst [vmem:[#allocation2 + $0x28] sm:$0xff] %v552
    %561 = vst [vmem:[#allocation2 + $0x30] sm:$0xff] %v553
    %562 = vst [vmem:[#allocation2 + $0x38] sm:$0xff] %v554
    // Predicated region
    $region22: #{_lm_head_matmul.1} parent=1 // pred_check
      %p563 = pneg %p40
    $region23: #{_lm_head_matmul.1} parent=1 // pred_check_branch
      %565 = sbr.rel (%p563) target = $region25
    $region24: #{_lm_head_matmul.1} parent=1 // pred_region
      %v566 = vld [vmem:[#allocation2] sm:$0xff]
      %v567 = vld [vmem:[#allocation2 + $0x8] sm:$0xff]
      %v568 = vld [vmem:[#allocation2 + $0x10] sm:$0xff]
      %v569 = vld [vmem:[#allocation2 + $0x18] sm:$0xff]
      %v570 = vld [vmem:[#allocation2 + $0x20] sm:$0xff]
      %v571 = vld [vmem:[#allocation2 + $0x28] sm:$0xff]
      %v572 = vld [vmem:[#allocation2 + $0x30] sm:$0xff]
      %v573 = vld [vmem:[#allocation2 + $0x38] sm:$0xff]
      %v574 = vpack.c.bf16 %v570, %v566
      %v575 = vpack.c.bf16 %v571, %v567
      %v576 = vpack.c.bf16 %v572, %v568
      %v577 = vpack.c.bf16 %v573, %v569
      %v582 = vunpack.c.l.b16 %v574
      %v583 = vunpack.c.l.b16 %v575
      %v584 = vunpack.c.l.b16 %v576
      %v585 = vunpack.c.l.b16 %v577
      %v586 = vunpack.c.h.b16 %v574
      %v587 = vunpack.c.h.b16 %v575
      %v588 = vunpack.c.h.b16 %v576
      %v589 = vunpack.c.h.b16 %v577
      %v590 = vpack.c.b16 %v583, %v582
      %v591 = vpack.c.b16 %v585, %v584
      %v592 = vpack.c.b16 %v587, %v586
      %v593 = vpack.c.b16 %v589, %v588
      %598 = vst [vmem:[#allocation8] sm:$0xff] %v590
      %599 = vst [vmem:[#allocation8 + $0x8] sm:$0xff] %v591
      %600 = vst [vmem:[#allocation8 + $0x10] sm:$0xff] %v592
      %601 = vst [vmem:[#allocation8 + $0x18] sm:$0xff] %v593
    $region25: #{_lm_head_matmul.1} parent=1 // pred_fallthru
      _
    // Predicated region
    $region26: #{_lm_head_matmul.1} parent=1 // pred_check
      _
    $region27: #{_lm_head_matmul.1} parent=1 // pred_check_branch
      %603 = sbr.rel (0) target = $region29
    $region28: #{_lm_head_matmul.1} parent=1 // pred_region
      %s605 = ssub.s32 512, 512
      %606 = vsyncadd [#allocation5], %s605
      %s607 = sshll.u32 [#allocation8], 4
      %s608 = int_to_ptr.vmem [resolvable:$true] %s607
      %613 = dma.vmem_to_hbm [thread:$0]  %s608, 512, %s2, [#allocation5], 256, 256, 16
    $region29: #{_lm_head_matmul.1} parent=1 // pred_fallthru
      _
    // Predicated region
    $region30: #{_lm_head_matmul.1} parent=1 // pred_check
      _
    $region31: #{_lm_head_matmul.1} parent=1 // pred_check_branch
      %615 = sbr.rel (0) target = $region33
    $region32: #{_lm_head_matmul.1} parent=1 // pred_region
      %616 = dma.done [#allocation5], 512
    $region33: #{_lm_head_matmul.1} parent=1 // pred_fallthru
      _
    %617 = vsyncpa [#allocation4], 1
    %618 = vsyncpa [#allocation7], 1
    %619 = vsyncpa [#allocation5], 1

</llo_original>
